<compile_context>
chip_gen: v6e
topology: v6e:2x2x1
jax: 0.10.0
libtpu: 0.0.40
codegen_flags: <defaults>
</compile_context>

<pallas_src>
import jax
import jax.numpy as jnp
from jax.experimental import pallas as pl
from jax.experimental.pallas import tpu as pltpu


def _make_kernel(n_layers):
    def kernel(w_ref, *refs):
        """w_ref: SMEM (N,) f32 normalized layer weights (scalar-prefetched).
        refs: n_layers hidden-state tiles (1, ts, th) in native dtype,
              mask tile (1, 1, ts) in native dtype,
              out tile (1, 1, th) f32 (resident accumulator across the s axis),
              msum scratch (1, 1) f32."""
        hs_refs = refs[:n_layers]
        mask_ref = refs[n_layers]
        out_ref = refs[n_layers + 1]
        msum_ref = refs[n_layers + 2]

        si = pl.program_id(2)

        @pl.when(si == 0)
        def _():
            out_ref[...] = jnp.zeros_like(out_ref)
            msum_ref[...] = jnp.zeros_like(msum_ref)

        mask = mask_ref[0]                       # (1, ts), native dtype (0/1 exact)
        acc = out_ref[0]                         # (1, th) f32 running sum
        for n in range(n_layers):                # static unroll; n_layers is small
            # Masked sequence reduction on the MXU (native dtype in, f32 accumulate).
            contrib = jnp.dot(mask, hs_refs[n][0],
                              preferred_element_type=jnp.float32)     # (1, th)
            acc = acc + w_ref[n] * contrib       # scalar f32 weight, tiny VPU cost
        out_ref[0] = acc

        # Mask-sum accumulator (recomputed per H tile: ts f32 adds/step, negligible).
        msum_ref[...] += jnp.sum(mask.astype(jnp.float32), axis=-1, keepdims=True)

        @pl.when(si == pl.num_programs(2) - 1)
        def _():
            denom = jnp.maximum(msum_ref[...], 1e-9)   # == clamp(min=1e-9)
            out_ref[0] = out_ref[0] / denom

    return kernel


def _vmem_capacity_bytes():
    try:
        return int(pltpu.get_tpu_info().vmem_capacity_bytes)
    except Exception:
        return 64 * 1024 * 1024  # conservative default: assume a 64 MiB (v7x-sized) part


def _pick_tiles(s, h, n_layers, itemsize, ts_max=None):
    """Generation-aware tile sizes: keep double-buffered tiles under a VMEM budget
    that fits v7x (64 MiB) and uses the extra headroom on v5e/v6e (128 MiB)."""
    cap = _vmem_capacity_bytes()
    if cap <= 64 * 1024 * 1024:            # v7x: 64 MiB VMEM per TensorCore
        hs_budget = 16 * 1024 * 1024
        vmem_limit = 40 * 1024 * 1024
    else:                                  # v5e / v6e: 128 MiB VMEM
        hs_budget = 48 * 1024 * 1024
        vmem_limit = 80 * 1024 * 1024

    # Hidden tile: multiple of 128 dividing H, <= 512, preferring H/th >= 2 so the
    # "parallel" hidden axis always gives both v7x TensorCores work.
    th = h
    if h % 128 == 0 and h > 128:
        for c in (512, 384, 256, 128):
            if h % c == 0 and h // c >= 2:
                th = c
                break

    def fits(c):
        hs_bytes = n_layers * 2 * c * th * itemsize      # double-buffered hs tiles
        other = 2 * c * itemsize + 2 * th * 4 + 4        # mask + out + msum buffers
        return hs_bytes + other <= hs_budget

    if s % 128 == 0:
        cands = sorted({c for c in (s, 4096, 2048, 1024, 512, 256, 128)
                        if c <= s and s % c == 0}, reverse=True)
        if ts_max is not None:
            cands = [c for c in cands if c <= ts_max] or [min(cands)]
        ts = None
        for c in cands:
            if fits(c):
                ts = c
                break
        if ts is None:
            ts = cands[-1]   # enforce the smallest legal tile if nothing fits the budget
    else:
        # TODO(synk): ragged S (not a multiple of 128) falls back to a full-extent S
        # block; pad S in the caller for very long ragged sequences.
        ts = s
    return ts, th, vmem_limit


def weighted_layer_pooling(all_hidden_states, attention_mask, layer_weights, last_n,
                           ts_max=None):
    """all_hidden_states: tuple/list of [B, S, H] arrays (any float dtype).
    attention_mask: [B, S] (int or float 0/1). layer_weights: [last_n]."""
    hs_layers = [jnp.asarray(hs) for hs in all_hidden_states[-last_n:]]  # no stack, no upcast
    n_layers = len(hs_layers)
    b, s, h = hs_layers[0].shape
    hs_dtype = hs_layers[0].dtype

    # Mask in the hidden-state dtype (0/1 is exact) shaped (B, 1, S): the block keeps
    # the last-two-dims layout constraint and feeds the MXU directly as the LHS.
    mask = jnp.asarray(attention_mask).astype(hs_dtype).reshape(b, 1, s)

    w = jnp.asarray(layer_weights).astype(jnp.float32)
    w_norm = w / jnp.sum(w)                 # fold 1/sum(w) into the scalar weights (f32)

    itemsize = jnp.dtype(hs_dtype).itemsize
    ts, th, vmem_limit = _pick_tiles(s, h, n_layers, itemsize, ts_max=ts_max)
    grid = (b, h // th, s // ts)

    hs_spec = pl.BlockSpec((1, ts, th), lambda bi, hi, si, _w: (bi, si, hi))
    mask_spec = pl.BlockSpec((1, 1, ts), lambda bi, hi, si, _w: (bi, 0, si))
    out_spec = pl.BlockSpec((1, 1, th), lambda bi, hi, si, _w: (bi, 0, hi))

    out = pl.pallas_call(
        _make_kernel(n_layers),
        out_shape=jax.ShapeDtypeStruct((b, 1, h), jnp.float32),
        grid_spec=pltpu.PrefetchScalarGridSpec(
            num_scalar_prefetch=1,          # normalized layer weights -> SMEM
            grid=grid,
            in_specs=[hs_spec] * n_layers + [mask_spec],
            out_specs=out_spec,
            scratch_shapes=[pltpu.VMEM((1, 1), jnp.float32)],   # mask-sum accumulator
        ),
        compiler_params=pltpu.CompilerParams(
            dimension_semantics=("parallel", "parallel", "arbitrary"),
            vmem_limit_bytes=vmem_limit,
        ),
    )(w_norm, *hs_layers, mask)
    return out.reshape(b, h)


def _reference(all_hidden_states, attention_mask, layer_weights, last_n):
    hs = jnp.stack(all_hidden_states)[-last_n:].astype(jnp.float32)    # (N, B, S, H)
    w = jnp.asarray(layer_weights).astype(jnp.float32)
    weighted = jnp.sum(w[:, None, None, None] * hs, axis=0) / jnp.sum(w)
    mask = jnp.asarray(attention_mask).astype(jnp.float32)[:, :, None]
    sum_emb = jnp.sum(weighted * mask, axis=1)
    sum_mask = jnp.clip(jnp.sum(mask, axis=1), 1e-9, None)
    return sum_emb / sum_mask


if __name__ == "__main__":
    key = jax.random.PRNGKey(0)
    num_layers, last_n = 6, 4
    # Small shapes; ts_max=128 forces 3 sequence steps (exercises the resident
    # accumulator) and H=256 splits into 2 hidden tiles (exercises the parallel H axis).
    B, S, H = 3, 384, 256

    keys = jax.random.split(key, num_layers)
    all_hidden_states = tuple(
        jax.random.normal(keys[i], (B, S, H), dtype=jnp.float32).astype(jnp.bfloat16)
        for i in range(num_layers)
    )
    # masks: full row, partial row (last sequence tile fully masked), and an all-zero
    # row (exercises the clamp(min=1e-9) path).
    lengths = jnp.array([S, 254, 0], dtype=jnp.int32)
    attention_mask = (jnp.arange(S)[None, :] < lengths[:, None]).astype(jnp.int32)

    # varied layer weights to exercise the weighting path
    layer_weights = 1.0 + 0.5 * jnp.arange(last_n, dtype=jnp.float32)

    out = weighted_layer_pooling(all_hidden_states, attention_mask, layer_weights,
                                 last_n, ts_max=128)
    out = jax.block_until_ready(out)

    ref = _reference(all_hidden_states, attention_mask, layer_weights, last_n)
    assert out.shape == (B, H)
    err = jnp.max(jnp.abs(out - ref))
    assert jnp.allclose(out, ref, atol=2e-3, rtol=2e-3), f"mismatch vs reference (max abs err {err})"
    print("KERNEL_OK")
</pallas_src>

<mosaic_0001>
module attributes {stable_mosaic.version = 11 : i64} {
  func.func @kernel(%arg0: i32, %arg1: i32, %arg2: i32, %arg3: memref<4xf32, #tpu.memory_space<smem>>, %arg4: memref<1x128x128xbf16, #tpu.memory_space<vmem>>, %arg5: memref<1x128x128xbf16, #tpu.memory_space<vmem>>, %arg6: memref<1x128x128xbf16, #tpu.memory_space<vmem>>, %arg7: memref<1x128x128xbf16, #tpu.memory_space<vmem>>, %arg8: memref<1x1x128xbf16, #tpu.memory_space<vmem>>, %arg9: memref<1x1x128xf32, #tpu.memory_space<vmem>>, %arg10: memref<1x1xf32, #tpu.memory_space<vmem>>) attributes {dimension_semantics = [#tpu.dimension_semantics<parallel>, #tpu.dimension_semantics<parallel>, #tpu.dimension_semantics<arbitrary>], iteration_bounds = array<i64: 3, 2, 3>, scalar_prefetch = 1 : i64, scratch_operands = 1 : i64, tpu.core_type = #tpu.core_type<tc>, window_params = [{transform_indices = @transform_0, window_bounds = array<i64: 1, 128, 128>}, {transform_indices = @transform_1, window_bounds = array<i64: 1, 128, 128>}, {transform_indices = @transform_2, window_bounds = array<i64: 1, 128, 128>}, {transform_indices = @transform_3, window_bounds = array<i64: 1, 128, 128>}, {transform_indices = @transform_4, window_bounds = array<i64: 1, 1, 128>}, {transform_indices = @transform_5, window_bounds = array<i64: 1, 1, 128>}]} {
    %c0_i32 = arith.constant 0 : i32
    %0 = arith.cmpi eq, %arg2, %c0_i32 : i32
    %1 = arith.extui %0 : i1 to i32
    %c0_i32_0 = arith.constant 0 : i32
    %2 = arith.cmpi ne, %1, %c0_i32_0 : i32
    scf.if %2 {
      %cst_31 = arith.constant 0.000000e+00 : f32
      %47 = vector.broadcast %cst_31 : f32 to vector<1x1x128xf32>
      %c0_32 = arith.constant 0 : index
      %c0_33 = arith.constant 0 : index
      %c0_34 = arith.constant 0 : index
      %48 = vector.load %arg9[%c0_32, %c0_33, %c0_34] : memref<1x1x128xf32, #tpu.memory_space<vmem>>, vector<1x1x128xf32>
      tpu.vector_store %arg9[%c0_32, %c0_33, %c0_34], %47 {strides = array<i32>} : memref<1x1x128xf32, #tpu.memory_space<vmem>>, vector<1x1x128xf32>,
      %cst_35 = arith.constant 0.000000e+00 : f32
      %49 = vector.broadcast %cst_35 : f32 to vector<1x1xf32>
      %c0_36 = arith.constant 0 : index
      %c0_37 = arith.constant 0 : index
      %50 = vector.load %arg10[%c0_36, %c0_37] : memref<1x1xf32, #tpu.memory_space<vmem>>, vector<1x1xf32>
      tpu.vector_store %arg10[%c0_36, %c0_37], %49 {strides = array<i32>} : memref<1x1xf32, #tpu.memory_space<vmem>>, vector<1x1xf32>,
    } else {
    }
    %c0 = arith.constant 0 : index
    %c0_1 = arith.constant 0 : index
    %c0_2 = arith.constant 0 : index
    %3 = vector.load %arg8[%c0, %c0_1, %c0_2] : memref<1x1x128xbf16, #tpu.memory_space<vmem>>, vector<1x1x128xbf16>
    %4 = vector.shape_cast %3 : vector<1x1x128xbf16> to vector<1x128xbf16>
    %c0_3 = arith.constant 0 : index
    %c0_4 = arith.constant 0 : index
    %c0_5 = arith.constant 0 : index
    %5 = vector.load %arg9[%c0_3, %c0_4, %c0_5] : memref<1x1x128xf32, #tpu.memory_space<vmem>>, vector<1x1x128xf32>
    %6 = vector.shape_cast %5 : vector<1x1x128xf32> to vector<1x128xf32>
    %c0_6 = arith.constant 0 : index
    %c0_7 = arith.constant 0 : index
    %c0_8 = arith.constant 0 : index
    %7 = vector.load %arg4[%c0_6, %c0_7, %c0_8] : memref<1x128x128xbf16, #tpu.memory_space<vmem>>, vector<1x128x128xbf16>
    %8 = vector.shape_cast %7 : vector<1x128x128xbf16> to vector<128x128xbf16>
    %cst = arith.constant dense<0.000000e+00> : vector<1x128xf32>
    %9 = tpu.matmul %4, %8, %cst {dimension_numbers = #tpu.dot_dimension_numbers<[1], [0], [0], [1], [0, 0, 1, 1], [], []>} : vector<1x128xbf16>, vector<128x128xbf16>, vector<1x128xf32> -> vector<1x128xf32>
    %c0_9 = arith.constant 0 : index
    %10 = memref.load %arg3[%c0_9] : memref<4xf32, #tpu.memory_space<smem>>
    %11 = vector.broadcast %10 : f32 to vector<1x128xf32>
    %12 = arith.mulf %11, %9 : vector<1x128xf32>
    %13 = arith.addf %6, %12 : vector<1x128xf32>
    %c0_10 = arith.constant 0 : index
    %c0_11 = arith.constant 0 : index
    %c0_12 = arith.constant 0 : index
    %14 = vector.load %arg5[%c0_10, %c0_11, %c0_12] : memref<1x128x128xbf16, #tpu.memory_space<vmem>>, vector<1x128x128xbf16>
    %15 = vector.shape_cast %14 : vector<1x128x128xbf16> to vector<128x128xbf16>
    %cst_13 = arith.constant dense<0.000000e+00> : vector<1x128xf32>
    %16 = tpu.matmul %4, %15, %cst_13 {dimension_numbers = #tpu.dot_dimension_numbers<[1], [0], [0], [1], [0, 0, 1, 1], [], []>} : vector<1x128xbf16>, vector<128x128xbf16>, vector<1x128xf32> -> vector<1x128xf32>
    %c1 = arith.constant 1 : index
    %17 = memref.load %arg3[%c1] : memref<4xf32, #tpu.memory_space<smem>>
    %18 = vector.broadcast %17 : f32 to vector<1x128xf32>
    %19 = arith.mulf %18, %16 : vector<1x128xf32>
    %20 = arith.addf %13, %19 : vector<1x128xf32>
    %c0_14 = arith.constant 0 : index
    %c0_15 = arith.constant 0 : index
    %c0_16 = arith.constant 0 : index
    %21 = vector.load %arg6[%c0_14, %c0_15, %c0_16] : memref<1x128x128xbf16, #tpu.memory_space<vmem>>, vector<1x128x128xbf16>
    %22 = vector.shape_cast %21 : vector<1x128x128xbf16> to vector<128x128xbf16>
    %cst_17 = arith.constant dense<0.000000e+00> : vector<1x128xf32>
    %23 = tpu.matmul %4, %22, %cst_17 {dimension_numbers = #tpu.dot_dimension_numbers<[1], [0], [0], [1], [0, 0, 1, 1], [], []>} : vector<1x128xbf16>, vector<128x128xbf16>, vector<1x128xf32> -> vector<1x128xf32>
    %c2 = arith.constant 2 : index
    %24 = memref.load %arg3[%c2] : memref<4xf32, #tpu.memory_space<smem>>
    %25 = vector.broadcast %24 : f32 to vector<1x128xf32>
    %26 = arith.mulf %25, %23 : vector<1x128xf32>
    %27 = arith.addf %20, %26 : vector<1x128xf32>
    %c0_18 = arith.constant 0 : index
    %c0_19 = arith.constant 0 : index
    %c0_20 = arith.constant 0 : index
    %28 = vector.load %arg7[%c0_18, %c0_19, %c0_20] : memref<1x128x128xbf16, #tpu.memory_space<vmem>>, vector<1x128x128xbf16>
    %29 = vector.shape_cast %28 : vector<1x128x128xbf16> to vector<128x128xbf16>
    %cst_21 = arith.constant dense<0.000000e+00> : vector<1x128xf32>
    %30 = tpu.matmul %4, %29, %cst_21 {dimension_numbers = #tpu.dot_dimension_numbers<[1], [0], [0], [1], [0, 0, 1, 1], [], []>} : vector<1x128xbf16>, vector<128x128xbf16>, vector<1x128xf32> -> vector<1x128xf32>
    %c3 = arith.constant 3 : index
    %31 = memref.load %arg3[%c3] : memref<4xf32, #tpu.memory_space<smem>>
    %32 = vector.broadcast %31 : f32 to vector<1x128xf32>
    %33 = arith.mulf %32, %30 : vector<1x128xf32>
    %34 = arith.addf %27, %33 : vector<1x128xf32>
    %c0_22 = arith.constant 0 : index
    %c0_23 = arith.constant 0 : index
    %c0_24 = arith.constant 0 : index
    %35 = vector.load %arg9[%c0_22, %c0_23, %c0_24] : memref<1x1x128xf32, #tpu.memory_space<vmem>>, vector<1x1x128xf32>
    %36 = vector.shape_cast %35 : vector<1x1x128xf32> to vector<1x128xf32>
    %37 = vector.shape_cast %34 : vector<1x128xf32> to vector<1x1x128xf32>
    tpu.vector_store %arg9[%c0_22, %c0_23, %c0_24], %37 {strides = array<i32>} : memref<1x1x128xf32, #tpu.memory_space<vmem>>, vector<1x1x128xf32>,
    %c0_25 = arith.constant 0 : index
    %c0_26 = arith.constant 0 : index
    %38 = vector.load %arg10[%c0_25, %c0_26] : memref<1x1xf32, #tpu.memory_space<vmem>>, vector<1x1xf32>
    %39 = arith.extf %4 : vector<1x128xbf16> to vector<1x128xf32>
    %cst_27 = arith.constant dense<0.000000e+00> : vector<1xf32>
    %40 = vector.multi_reduction <add>, %39, %cst_27 [1] : vector<1x128xf32> to vector<1xf32>
    %41 = vector.shape_cast %40 : vector<1xf32> to vector<1x1xf32>
    %42 = arith.addf %38, %41 : vector<1x1xf32>
    %c0_28 = arith.constant 0 : index
    %c0_29 = arith.constant 0 : index
    %43 = vector.load %arg10[%c0_28, %c0_29] : memref<1x1xf32, #tpu.memory_space<vmem>>, vector<1x1xf32>
    tpu.vector_store %arg10[%c0_28, %c0_29], %42 {strides = array<i32>} : memref<1x1xf32, #tpu.memory_space<vmem>>, vector<1x1xf32>,
    %c2_i32 = arith.constant 2 : i32
    %44 = arith.cmpi eq, %arg2, %c2_i32 : i32
    %45 = arith.extui %44 : i1 to i32
    %c0_i32_30 = arith.constant 0 : i32
    %46 = arith.cmpi ne, %45, %c0_i32_30 : i32
    scf.if %46 {
      %c0_31 = arith.constant 0 : index
      %c0_32 = arith.constant 0 : index
      %47 = vector.load %arg10[%c0_31, %c0_32] : memref<1x1xf32, #tpu.memory_space<vmem>>, vector<1x1xf32>
      %cst_33 = arith.constant 9.99999971E-10 : f32
      %48 = vector.broadcast %cst_33 : f32 to vector<1x1xf32>
      %49 = arith.maximumf %47, %48 : vector<1x1xf32>
      %c0_34 = arith.constant 0 : index
      %c0_35 = arith.constant 0 : index
      %c0_36 = arith.constant 0 : index
      %50 = vector.load %arg9[%c0_34, %c0_35, %c0_36] : memref<1x1x128xf32, #tpu.memory_space<vmem>>, vector<1x1x128xf32>
      %51 = vector.shape_cast %50 : vector<1x1x128xf32> to vector<1x128xf32>
      %52 = vector.broadcast %49 : vector<1x1xf32> to vector<1x128xf32>
      %53 = arith.divf %51, %52 : vector<1x128xf32>
      %c0_37 = arith.constant 0 : index
      %c0_38 = arith.constant 0 : index
      %c0_39 = arith.constant 0 : index
      %54 = vector.load %arg9[%c0_37, %c0_38, %c0_39] : memref<1x1x128xf32, #tpu.memory_space<vmem>>, vector<1x1x128xf32>
      %55 = vector.shape_cast %54 : vector<1x1x128xf32> to vector<1x128xf32>
      %56 = vector.shape_cast %53 : vector<1x128xf32> to vector<1x1x128xf32>
      tpu.vector_store %arg9[%c0_37, %c0_38, %c0_39], %56 {strides = array<i32>} : memref<1x1x128xf32, #tpu.memory_space<vmem>>, vector<1x1x128xf32>,
    } else {
    }
    return
  }
  func.func @transform_0(%arg0: i32, %arg1: i32, %arg2: i32, %arg3: memref<4xf32, #tpu.memory_space<smem>>) -> (i32, i32, i32) {
    %c0_i32 = arith.constant 0 : i32
    return %arg0, %arg2, %arg1 : i32, i32, i32
  }
  func.func @transform_1(%arg0: i32, %arg1: i32, %arg2: i32, %arg3: memref<4xf32, #tpu.memory_space<smem>>) -> (i32, i32, i32) {
    %c0_i32 = arith.constant 0 : i32
    return %arg0, %arg2, %arg1 : i32, i32, i32
  }
  func.func @transform_2(%arg0: i32, %arg1: i32, %arg2: i32, %arg3: memref<4xf32, #tpu.memory_space<smem>>) -> (i32, i32, i32) {
    %c0_i32 = arith.constant 0 : i32
    return %arg0, %arg2, %arg1 : i32, i32, i32
  }
  func.func @transform_3(%arg0: i32, %arg1: i32, %arg2: i32, %arg3: memref<4xf32, #tpu.memory_space<smem>>) -> (i32, i32, i32) {
    %c0_i32 = arith.constant 0 : i32
    return %arg0, %arg2, %arg1 : i32, i32, i32
  }
  func.func @transform_4(%arg0: i32, %arg1: i32, %arg2: i32, %arg3: memref<4xf32, #tpu.memory_space<smem>>) -> (i32, i32, i32) {
    %c0_i32 = arith.constant 0 : i32
    %c0_i32_0 = arith.constant 0 : i32
    return %arg0, %c0_i32, %arg2 : i32, i32, i32
  }
  func.func @transform_5(%arg0: i32, %arg1: i32, %arg2: i32, %arg3: memref<4xf32, #tpu.memory_space<smem>>) -> (i32, i32, i32) {
    %c0_i32 = arith.constant 0 : i32
    %c0_i32_0 = arith.constant 0 : i32
    return %arg0, %c0_i32, %arg1 : i32, i32, i32
  }
}

</mosaic_0001>

<llo_original>
// kernel: tpu_custom_call.1
$region0: #{tpu_custom_call.1}
  #allocation0 [shape = 'u32[]', space=smem, size = 0x4, offset = 0x4, fixed_abs, tag = 'smem constant byte address 0x4 - core index']
  #allocation1 [shape = 'u32[144,128]{1,0:T(1,128)}', space=vmem, size = 0x12000, scoped, tag = 'internal scratch']
  #allocation2 [shape = 'f32[1,1]{1,0:T(1,128)}', space=vmem, size = 0x200, scoped, tag = 'scratch operand']
  #allocation3 [shape = 's32[1]{0}', space=sflag, size = 0x4, scoped, tag = 'scoped memory for tpu_custom_call.1']
  #allocation4 [shape = 'u8[512]{0}', space=smem, size = 0x200, scoped, tag = 'prefetched SMEM operand 0']
  %s0 = inlined_call_operand.vmem [shape: f32[4], index: 0, kind: input, shape index: {}]
  %s1 = inlined_call_operand.hbm [shape: bf16[3,384,256], index: 1, kind: input, shape index: {}]
  %s2 = inlined_call_operand.hbm [shape: bf16[3,384,256], index: 2, kind: input, shape index: {}]
  %s3 = inlined_call_operand.hbm [shape: bf16[3,384,256], index: 3, kind: input, shape index: {}]
  %s4 = inlined_call_operand.hbm [shape: bf16[3,384,256], index: 4, kind: input, shape index: {}]
  %s5 = inlined_call_operand.vmem [shape: bf16[3,1,384], index: 5, kind: input, shape index: {}]
  %s6 = inlined_call_operand.hbm [shape: f32[3,1,256], index: 6, kind: output, shape index: {}]
  %s7 = sld [smem:[#allocation0]]
  $region77: #{tpu_custom_call.1} parent=0
    _
  %s9 = ssub.s32 1, %s7
  %s10 = scalar_select 0, %s9, %s7
  %s11 = sshll.u32 %s0, 4
  %s12 = int_to_ptr.vmem [resolvable:$true] %s11
  %14 = dma.vmem_to_smem %s12, 16, [#allocation4], [#allocation3]
  %15 = dma.done [#allocation3], 16
  %16 = sfence
  $region1: #{tpu_custom_call.1} parent=0
    #allocation5 [shape = 'u8[65536]{0}', space=vmem, size = 0x10000, scoped, tag = 'input window, operand 1']
    #allocation6 [shape = 's32[2]{0}', space=sflag, size = 0x8, scoped, tag = 'scoped memory for tpu_custom_call.1']
    #allocation7 [shape = 's32[2]{0}', space=sflag, size = 0x8, scoped, tag = 'scoped memory for tpu_custom_call.1']
    #allocation8 [shape = 'u8[65536]{0}', space=vmem, size = 0x10000, scoped, tag = 'input window, operand 2']
    #allocation9 [shape = 's32[2]{0}', space=sflag, size = 0x8, scoped, tag = 'scoped memory for tpu_custom_call.1']
    #allocation10 [shape = 'u8[65536]{0}', space=vmem, size = 0x10000, scoped, tag = 'input window, operand 3']
    #allocation11 [shape = 'u8[65536]{0}', space=vmem, size = 0x10000, scoped, tag = 'input window, operand 4']
    #allocation12 [shape = 's32[2]{0}', space=sflag, size = 0x8, scoped, tag = 'scoped memory for tpu_custom_call.1']
    #allocation13 [shape = 'u8[1024]{0}', space=vmem, size = 0x400, scoped, tag = 'output window, operand 0']
    %17 = vsyncpa [#allocation6], 0
    %s18 = scalar_lea.sflag [#allocation6], 1
    %19 = vsyncpa %s18, 0
    %20 = vsyncpa [#allocation9], 0
    %s21 = scalar_lea.sflag [#allocation9], 1
    %22 = vsyncpa %s21, 0
    %23 = vsyncpa [#allocation12], 0
    %s24 = scalar_lea.sflag [#allocation12], 1
    %25 = vsyncpa %s24, 0
    %26 = vsyncpa [#allocation7], 0
    %s27 = scalar_lea.sflag [#allocation7], 1
    %28 = vsyncpa %s27, 0
    loop: start=0, step=1, limit=20
    $region2: #{tpu_custom_call.1} parent=1 // loop_pre_header
      _
    $region3: #{tpu_custom_call.1} parent=1 // loop_header
      %s30 = sphi 0, %s34
      %p31 = scmp.ge.s32.totalorder %s30, 20
      %s37 = sphi 0, %s56
      %s38 = sphi 0, %s52
      %s39 = sphi 0, %s48
      %s40 = sphi 0, %s37
      %s41 = sphi 0, %s38
      %s42 = sphi 0, %s39
      %s43 = sphi 0, %s40
      %s44 = sphi 0, %s41
      %s45 = sphi 0, %s42
      %s63 = sphi 0, %s65
      %s66 = sphi 0, %s63
      %s67 = sphi 0, %s66
      %s83 = sphi 0, %s67
      %s93 = sphi 0, %s95
      %s96 = sphi 0, %s93
      %s97 = sphi 0, %s96
      %s113 = sphi 0, %s97
      %s123 = sphi 0, %s125
      %s126 = sphi 0, %s123
      %s127 = sphi 0, %s126
      %s143 = sphi 0, %s127
      %s153 = sphi 0, %s155
      %s156 = sphi 0, %s153
      %s157 = sphi 0, %s156
      %s173 = sphi 0, %s157
      %s181 = sphi 0, %s183
      %s184 = sphi 0, %s181
      %s185 = sphi 0, %s184
      %s201 = sphi 0, %s185
      %s209 = sphi 0, %s211
      %s212 = sphi 0, %s209
      %s213 = sphi 0, %s212
      %s229 = sphi 0, %s213
    $region4: #{tpu_custom_call.1} parent=1 // loop_header_branch
      %33 = sbr.rel (%p31) target = $region8
    $region5: #{tpu_custom_call.1} parent=1 // loop_body
      %s35 = ssub.s32 %s30, 1
      %s36 = ssub.s32 %s30, 2
      %s46 = sadd.s32 1, %s39
      %p47 = scmp.ge.s32.totalorder %s46, 3
      %s48 = scalar_select %p47, 0, %s46
      %s49 = sadd.s32 1, %s38
      %s50 = scalar_select %p47, %s49, %s38
      %p51 = scmp.ge.s32.totalorder %s50, 2
      %s52 = scalar_select %p51, 0, %s50
      %s53 = sadd.s32 1, %s37
      %s54 = scalar_select %p51, %s53, %s37
      %p55 = scmp.ge.s32.totalorder %s54, 3
      %s56 = scalar_select %p55, 0, %s54
      %s57 = ssub.s32 %s37, %s56
      %s58 = ssub.s32 %s39, %s48
      %s59 = sor.u32 %s57, %s58
      %s60 = ssub.s32 %s38, %s52
      %s61 = sor.u32 %s59, %s60
      %p62 = scmp.eq.s32.totalorder %s61, 0
      %s64 = sadd.s32 %s63, 1
      %s65 = scalar_select %p62, %s63, %s64
      %p68 = pneg %p62
      %p69 = scmp.eq.s32.totalorder %s30, 17
      %p70 = por %p68, %p69
      %p71 = scmp.ne.s32.totalorder %s63, %s66
      %p72 = scmp.eq.s32.totalorder %s30, 0
      %p73 = por %p71, %p72
      %p74 = scmp.ne.s32.totalorder %s63, %s66
      %p75 = scmp.eq.s32.totalorder %s35, 17
      %p76 = por %p74, %p75
      %p77 = scmp.ne.s32.totalorder %s66, %s67
      %p78 = scmp.eq.s32.totalorder %s35, 0
      %p79 = por %p77, %p78
      %p80 = scmp.ne.s32.totalorder %s66, %s67
      %p81 = scmp.eq.s32.totalorder %s36, 17
      %p82 = por %p80, %p81
      %p84 = scmp.ne.s32.totalorder %s67, %s83
      %p85 = scmp.eq.s32.totalorder %s36, 0
      %p86 = por %p84, %p85
      %s87 = ssub.s32 %s37, %s56
      %s88 = ssub.s32 %s39, %s48
      %s89 = sor.u32 %s87, %s88
      %s90 = ssub.s32 %s38, %s52
      %s91 = sor.u32 %s89, %s90
      %p92 = scmp.eq.s32.totalorder %s91, 0
      %s94 = sadd.s32 %s93, 1
      %s95 = scalar_select %p92, %s93, %s94
      %p98 = pneg %p92
      %p99 = scmp.eq.s32.totalorder %s30, 17
      %p100 = por %p98, %p99
      %p101 = scmp.ne.s32.totalorder %s93, %s96
      %p102 = scmp.eq.s32.totalorder %s30, 0
      %p103 = por %p101, %p102
      %p104 = scmp.ne.s32.totalorder %s93, %s96
      %p105 = scmp.eq.s32.totalorder %s35, 17
      %p106 = por %p104, %p105
      %p107 = scmp.ne.s32.totalorder %s96, %s97
      %p108 = scmp.eq.s32.totalorder %s35, 0
      %p109 = por %p107, %p108
      %p110 = scmp.ne.s32.totalorder %s96, %s97
      %p111 = scmp.eq.s32.totalorder %s36, 17
      %p112 = por %p110, %p111
      %p114 = scmp.ne.s32.totalorder %s97, %s113
      %p115 = scmp.eq.s32.totalorder %s36, 0
      %p116 = por %p114, %p115
      %s117 = ssub.s32 %s37, %s56
      %s118 = ssub.s32 %s39, %s48
      %s119 = sor.u32 %s117, %s118
      %s120 = ssub.s32 %s38, %s52
      %s121 = sor.u32 %s119, %s120
      %p122 = scmp.eq.s32.totalorder %s121, 0
      %s124 = sadd.s32 %s123, 1
      %s125 = scalar_select %p122, %s123, %s124
      %p128 = pneg %p122
      %p129 = scmp.eq.s32.totalorder %s30, 17
      %p130 = por %p128, %p129
      %p131 = scmp.ne.s32.totalorder %s123, %s126
      %p132 = scmp.eq.s32.totalorder %s30, 0
      %p133 = por %p131, %p132
      %p134 = scmp.ne.s32.totalorder %s123, %s126
      %p135 = scmp.eq.s32.totalorder %s35, 17
      %p136 = por %p134, %p135
      %p137 = scmp.ne.s32.totalorder %s126, %s127
      %p138 = scmp.eq.s32.totalorder %s35, 0
      %p139 = por %p137, %p138
      %p140 = scmp.ne.s32.totalorder %s126, %s127
      %p141 = scmp.eq.s32.totalorder %s36, 17
      %p142 = por %p140, %p141
      %p144 = scmp.ne.s32.totalorder %s127, %s143
      %p145 = scmp.eq.s32.totalorder %s36, 0
      %p146 = por %p144, %p145
      %s147 = ssub.s32 %s37, %s56
      %s148 = ssub.s32 %s39, %s48
      %s149 = sor.u32 %s147, %s148
      %s150 = ssub.s32 %s38, %s52
      %s151 = sor.u32 %s149, %s150
      %p152 = scmp.eq.s32.totalorder %s151, 0
      %s154 = sadd.s32 %s153, 1
      %s155 = scalar_select %p152, %s153, %s154
      %p158 = pneg %p152
      %p159 = scmp.eq.s32.totalorder %s30, 17
      %p160 = por %p158, %p159
      %p161 = scmp.ne.s32.totalorder %s153, %s156
      %p162 = scmp.eq.s32.totalorder %s30, 0
      %p163 = por %p161, %p162
      %p164 = scmp.ne.s32.totalorder %s153, %s156
      %p165 = scmp.eq.s32.totalorder %s35, 17
      %p166 = por %p164, %p165
      %p167 = scmp.ne.s32.totalorder %s156, %s157
      %p168 = scmp.eq.s32.totalorder %s35, 0
      %p169 = por %p167, %p168
      %p170 = scmp.ne.s32.totalorder %s156, %s157
      %p171 = scmp.eq.s32.totalorder %s36, 17
      %p172 = por %p170, %p171
      %p174 = scmp.ne.s32.totalorder %s157, %s173
      %p175 = scmp.eq.s32.totalorder %s36, 0
      %p176 = por %p174, %p175
      %s177 = ssub.s32 %s37, %s56
      %s178 = ssub.s32 %s39, %s48
      %s179 = sor.u32 %s177, %s178
      %p180 = scmp.eq.s32.totalorder %s179, 0
      %s182 = sadd.s32 %s181, 1
      %s183 = scalar_select %p180, %s181, %s182
      %p186 = pneg %p180
      %p187 = scmp.eq.s32.totalorder %s30, 17
      %p188 = por %p186, %p187
      %p189 = scmp.ne.s32.totalorder %s181, %s184
      %p190 = scmp.eq.s32.totalorder %s30, 0
      %p191 = por %p189, %p190
      %p192 = scmp.ne.s32.totalorder %s181, %s184
      %p193 = scmp.eq.s32.totalorder %s35, 17
      %p194 = por %p192, %p193
      %p195 = scmp.ne.s32.totalorder %s184, %s185
      %p196 = scmp.eq.s32.totalorder %s35, 0
      %p197 = por %p195, %p196
      %p198 = scmp.ne.s32.totalorder %s184, %s185
      %p199 = scmp.eq.s32.totalorder %s36, 17
      %p200 = por %p198, %p199
      %p202 = scmp.ne.s32.totalorder %s185, %s201
      %p203 = scmp.eq.s32.totalorder %s36, 0
      %p204 = por %p202, %p203
      %s205 = ssub.s32 %s37, %s56
      %s206 = ssub.s32 %s38, %s52
      %s207 = sor.u32 %s205, %s206
      %p208 = scmp.eq.s32.totalorder %s207, 0
      %s210 = sadd.s32 %s209, 1
      %s211 = scalar_select %p208, %s209, %s210
      %p214 = pneg %p208
      %p215 = scmp.eq.s32.totalorder %s30, 17
      %p216 = por %p214, %p215
      %p217 = scmp.ne.s32.totalorder %s209, %s212
      %p218 = scmp.eq.s32.totalorder %s30, 0
      %p219 = por %p217, %p218
      %p220 = scmp.ne.s32.totalorder %s209, %s212
      %p221 = scmp.eq.s32.totalorder %s35, 17
      %p222 = por %p220, %p221
      %p223 = scmp.ne.s32.totalorder %s212, %s213
      %p224 = scmp.eq.s32.totalorder %s35, 0
      %p225 = por %p223, %p224
      %p226 = scmp.ne.s32.totalorder %s212, %s213
      %p227 = scmp.eq.s32.totalorder %s36, 17
      %p228 = por %p226, %p227
      %p230 = scmp.ne.s32.totalorder %s213, %s229
      %p231 = scmp.eq.s32.totalorder %s36, 0
      %p232 = por %p230, %p231
      %p233 = scmp.le.s32.totalorder 1, %s30
      %p234 = scmp.lt.s32.totalorder %s30, 19
      %p235 = pnand %p233, %p234
      %p236 = pneg %p235
      // Predicated region
      $region9: #{tpu_custom_call.1} parent=5 // pred_check
        _
      $region10: #{tpu_custom_call.1} parent=5 // pred_check_branch
        %238 = sbr.rel (%p235) target = $region12
      $region11: #{tpu_custom_call.1} parent=5 // pred_region
        %s239 = ssub.s32 %s30, 1
      $region12: #{tpu_custom_call.1} parent=5 // pred_fallthru
        _
      %p240 = scmp.lt.s32.totalorder %s30, 18
      // Predicated region
      $region13: #{tpu_custom_call.1} parent=5 // pred_check
        %p241 = pneg %p240
      $region14: #{tpu_custom_call.1} parent=5 // pred_check_branch
        %243 = sbr.rel (%p241) target = $region16
      $region15: #{tpu_custom_call.1} parent=5 // pred_region
        // Predicated region
        $region17: #{tpu_custom_call.1} parent=15 // pred_check
          %p244 = pneg %p73
        $region18: #{tpu_custom_call.1} parent=15 // pred_check_branch
          %246 = sbr.rel (%p244) target = $region20
        $region19: #{tpu_custom_call.1} parent=15 // pred_region
          %s247 = sand.u32 %s63, 1
          %s248 = scalar_lea.sflag [#allocation6], %s247
          %s249 = sand.u32 %s63, 1
          %s250 = smul.addr %s249, 64
          %s251 = scalar_lea.vmem [#allocation5], %s250
          %s252 = smul.u32 16, %s39
          %s254 = ssub.s32 1024, 1024
          %255 = vsyncadd %s248, %s254
          %s256 = smul.addr %s252, 2
          %s257 = sadd.s32 %s38, %s256
          %s258 = smul.addr %s37, 96
          %s259 = sadd.s32 %s257, %s258
          %s260 = smul.addr %s259, 64
          %s261 = scalar_lea.hbm %s1, %s260
          %s262 = sshll.u32 %s251, 4
          %s263 = int_to_ptr.vmem [resolvable:$true] %s262
          %268 = dma.hbm_to_vmem [thread:$0]  %s261, 1024, %s263, %s248, 128, 64, 4
        $region20: #{tpu_custom_call.1} parent=15 // pred_fallthru
          _
        // Predicated region
        $region21: #{tpu_custom_call.1} parent=15 // pred_check
          %p269 = pneg %p103
        $region22: #{tpu_custom_call.1} parent=15 // pred_check_branch
          %271 = sbr.rel (%p269) target = $region24
        $region23: #{tpu_custom_call.1} parent=15 // pred_region
          %s272 = sand.u32 %s30, 1
          %s273 = scalar_lea.sflag [#allocation9], %s272
          %s274 = sand.u32 %s93, 1
          %s275 = smul.addr %s274, 64
          %s276 = scalar_lea.vmem [#allocation8], %s275
          %s277 = smul.u32 16, %s39
          %s279 = ssub.s32 1024, 1024
          %280 = vsyncadd %s273, %s279
          %s281 = smul.addr %s277, 2
          %s282 = sadd.s32 %s38, %s281
          %s283 = smul.addr %s37, 96
          %s284 = sadd.s32 %s282, %s283
          %s285 = smul.addr %s284, 64
          %s286 = scalar_lea.hbm %s2, %s285
          %s287 = sshll.u32 %s276, 4
          %s288 = int_to_ptr.vmem [resolvable:$true] %s287
          %293 = dma.hbm_to_vmem [thread:$0]  %s286, 1024, %s288, %s273, 128, 64, 4
        $region24: #{tpu_custom_call.1} parent=15 // pred_fallthru
          _
        // Predicated region
        $region25: #{tpu_custom_call.1} parent=15 // pred_check
          %p294 = pneg %p133
        $region26: #{tpu_custom_call.1} parent=15 // pred_check_branch
          %296 = sbr.rel (%p294) target = $region28
        $region27: #{tpu_custom_call.1} parent=15 // pred_region
          %s297 = sand.u32 %s30, 1
          %s298 = scalar_lea.sflag [#allocation9], %s297
          %s299 = sand.u32 %s123, 1
          %s300 = smul.addr %s299, 64
          %s301 = scalar_lea.vmem [#allocation10], %s300
          %s302 = smul.u32 16, %s39
          %s304 = ssub.s32 1024, 1024
          %305 = vsyncadd %s298, %s304
          %s306 = smul.addr %s302, 2
          %s307 = sadd.s32 %s38, %s306
          %s308 = smul.addr %s37, 96
          %s309 = sadd.s32 %s307, %s308
          %s310 = smul.addr %s309, 64
          %s311 = scalar_lea.hbm %s3, %s310
          %s312 = sshll.u32 %s301, 4
          %s313 = int_to_ptr.vmem [resolvable:$true] %s312
          %318 = dma.hbm_to_vmem [thread:$0]  %s311, 1024, %s313, %s298, 128, 64, 4
        $region28: #{tpu_custom_call.1} parent=15 // pred_fallthru
          _
        // Predicated region
        $region29: #{tpu_custom_call.1} parent=15 // pred_check
          %p319 = pneg %p163
        $region30: #{tpu_custom_call.1} parent=15 // pred_check_branch
          %321 = sbr.rel (%p319) target = $region32
        $region31: #{tpu_custom_call.1} parent=15 // pred_region
          %s322 = sand.u32 %s153, 1
          %s323 = scalar_lea.sflag [#allocation12], %s322
          %s324 = sand.u32 %s153, 1
          %s325 = smul.addr %s324, 64
          %s326 = scalar_lea.vmem [#allocation11], %s325
          %s327 = smul.u32 16, %s39
          %s329 = ssub.s32 1024, 1024
          %330 = vsyncadd %s323, %s329
          %s331 = smul.addr %s327, 2
          %s332 = sadd.s32 %s38, %s331
          %s333 = smul.addr %s37, 96
          %s334 = sadd.s32 %s332, %s333
          %s335 = smul.addr %s334, 64
          %s336 = scalar_lea.hbm %s4, %s335
          %s337 = sshll.u32 %s326, 4
          %s338 = int_to_ptr.vmem [resolvable:$true] %s337
          %343 = dma.hbm_to_vmem [thread:$0]  %s336, 1024, %s338, %s323, 128, 64, 4
        $region32: #{tpu_custom_call.1} parent=15 // pred_fallthru
          _
        // Predicated region
        $region33: #{tpu_custom_call.1} parent=15 // pred_check
          %p344 = pneg %p191
        $region34: #{tpu_custom_call.1} parent=15 // pred_check_branch
          %346 = sbr.rel (%p344) target = $region36
        $region35: #{tpu_custom_call.1} parent=15 // pred_region
          %p347 = scmp.lt.s32.totalorder %s37, 2
          %s348 = scalar_select %p347, %s37, 2
          %p349 = scmp.lt.s32.totalorder %s39, 2
          %s350 = scalar_select %p349, %s39, 2
          %s351 = smul.addr %s348, 3
          %s352 = sadd.s32 %s350, %s351
          %s353 = scalar_lea.vmem %s5, %s352
        $region36: #{tpu_custom_call.1} parent=15 // pred_fallthru
          _
      $region16: #{tpu_custom_call.1} parent=5 // pred_fallthru
        _
      %p354 = scmp.le.s32.totalorder 1, %s30
      %p355 = scmp.lt.s32.totalorder %s30, 19
      %p356 = pnand %p354, %p355
      %p357 = pneg %p356
      // Predicated region
      $region37: #{tpu_custom_call.1} parent=5 // pred_check
        _
      $region38: #{tpu_custom_call.1} parent=5 // pred_check_branch
        %359 = sbr.rel (%p356) target = $region40
      $region39: #{tpu_custom_call.1} parent=5 // pred_region
        %s360 = ssub.s32 %s30, 1
        %s361 = sand.u32 %s66, 1
        %s362 = scalar_lea.sflag [#allocation6], %s361
        %s363 = sand.u32 %s66, 1
        %s364 = smul.addr %s363, 64
        %s365 = scalar_lea.vmem [#allocation5], %s364
        // Predicated region
        $region41: #{tpu_custom_call.1} parent=39 // pred_check
          %p366 = pneg %p79
        $region42: #{tpu_custom_call.1} parent=39 // pred_check_branch
          %368 = sbr.rel (%p366) target = $region44
        $region43: #{tpu_custom_call.1} parent=39 // pred_region
          %369 = dma.done %s362, 1024
        $region44: #{tpu_custom_call.1} parent=39 // pred_fallthru
          _
        %s370 = sand.u32 %s35, 1
        %s371 = scalar_lea.sflag [#allocation9], %s370
        %s372 = sand.u32 %s96, 1
        %s373 = smul.addr %s372, 64
        %s374 = scalar_lea.vmem [#allocation8], %s373
        // Predicated region
        $region45: #{tpu_custom_call.1} parent=39 // pred_check
          %p375 = pneg %p109
        $region46: #{tpu_custom_call.1} parent=39 // pred_check_branch
          %377 = sbr.rel (%p375) target = $region48
        $region47: #{tpu_custom_call.1} parent=39 // pred_region
          %378 = dma.done %s371, 1024
        $region48: #{tpu_custom_call.1} parent=39 // pred_fallthru
          _
        %s379 = sand.u32 %s35, 1
        %s380 = scalar_lea.sflag [#allocation9], %s379
        %s381 = sand.u32 %s126, 1
        %s382 = smul.addr %s381, 64
        %s383 = scalar_lea.vmem [#allocation10], %s382
        // Predicated region
        $region49: #{tpu_custom_call.1} parent=39 // pred_check
          %p384 = pneg %p139
        $region50: #{tpu_custom_call.1} parent=39 // pred_check_branch
          %386 = sbr.rel (%p384) target = $region52
        $region51: #{tpu_custom_call.1} parent=39 // pred_region
          %387 = dma.done %s380, 1024
        $region52: #{tpu_custom_call.1} parent=39 // pred_fallthru
          _
        %s388 = sand.u32 %s156, 1
        %s389 = scalar_lea.sflag [#allocation12], %s388
        %s390 = sand.u32 %s156, 1
        %s391 = smul.addr %s390, 64
        %s392 = scalar_lea.vmem [#allocation11], %s391
        // Predicated region
        $region53: #{tpu_custom_call.1} parent=39 // pred_check
          %p393 = pneg %p169
        $region54: #{tpu_custom_call.1} parent=39 // pred_check_branch
          %395 = sbr.rel (%p393) target = $region56
        $region55: #{tpu_custom_call.1} parent=39 // pred_region
          %396 = dma.done %s389, 1024
        $region56: #{tpu_custom_call.1} parent=39 // pred_fallthru
          _
        %s397 = sand.u32 %s66, 1
        %s398 = scalar_lea.sflag [#allocation6], %s397
        %s399 = sand.u32 %s66, 1
        %s400 = smul.addr %s399, 64
        %s401 = scalar_lea.vmem [#allocation5], %s400
        %p402 = pneg %p79
        %p403 = pneg %p76
        %s404 = sand.u32 %s35, 1
        %s405 = scalar_lea.sflag [#allocation9], %s404
        %s406 = sand.u32 %s96, 1
        %s407 = smul.addr %s406, 64
        %s408 = scalar_lea.vmem [#allocation8], %s407
        %p409 = pneg %p109
        %p410 = pneg %p106
        %s411 = sand.u32 %s35, 1
        %s412 = scalar_lea.sflag [#allocation9], %s411
        %s413 = sand.u32 %s126, 1
        %s414 = smul.addr %s413, 64
        %s415 = scalar_lea.vmem [#allocation10], %s414
        %p416 = pneg %p139
        %p417 = pneg %p136
        %s418 = sand.u32 %s156, 1
        %s419 = scalar_lea.sflag [#allocation12], %s418
        %s420 = sand.u32 %s156, 1
        %s421 = smul.addr %s420, 64
        %s422 = scalar_lea.vmem [#allocation11], %s421
        %p423 = pneg %p169
        %p424 = pneg %p166
        %p425 = scmp.lt.s32.totalorder %s40, 2
        %s426 = scalar_select %p425, %s40, 2
        %p427 = scmp.lt.s32.totalorder %s42, 2
        %s428 = scalar_select %p427, %s42, 2
        %s429 = smul.addr %s426, 3
        %s430 = sadd.s32 %s428, %s429
        %s431 = scalar_lea.vmem %s5, %s430
        %p432 = pneg %p197
        %p433 = pneg %p194
        %p434 = pneg %p225
        %p435 = pneg %p222
        %s436 = sand.u32 %s212, 1
        %s437 = scalar_lea.sflag [#allocation7], %s436
        %s438 = sand.u32 %s212, 1
        %s439 = scalar_lea.vmem [#allocation13], %s438
        %s440 = smul.u32 16, %s42
        %s441 = smul.u32 16, %s42
        %s442 = smul.u32 16, %s42
        %s443 = smul.u32 16, %s42
        %p444 = scmp.lt.s32.totalorder %s40, 2
        %s445 = scalar_select %p444, %s40, 2
        %p446 = scmp.lt.s32.totalorder %s42, 2
        %s447 = scalar_select %p446, %s42, 2
        %s448 = smul.addr %s445, 3
        %s449 = sadd.s32 %s447, %s448
        %s450 = scalar_lea.vmem %s5, %s449
        %p452 = scmp.eq.s32.totalorder %s42, 0
        // Predicated region
        $region57: #{tpu_custom_call.1} parent=39 // pred_check
          %p453 = pneg %p452
        $region58: #{tpu_custom_call.1} parent=39 // pred_check_branch
          %455 = sbr.rel (%p453) target = $region60
        $region59: #{tpu_custom_call.1} parent=39 // pred_region
          %456 = vst [vmem:[%s439] sm:$0x1] 0.0
          %vm457 = vcmask 0
          %458 = vst.msk [vmem:[#allocation2] sm:$0x1] %vm457, 0.0
        $region60: #{tpu_custom_call.1} parent=39 // pred_fallthru
          _
        %v459 = vld [vmem:[%s450] sm:$0x1]
        %v460 = vld [vmem:[%s439] sm:$0x1]
        %v461 = vld [vmem:[%s365] sm:$0xf]
        %v462 = vld [vmem:[%s365 + $0x4] sm:$0xf]
        %v463 = vld [vmem:[%s365 + $0x8] sm:$0xf]
        %v464 = vld [vmem:[%s365 + $0xc] sm:$0xf]
        %v465 = vld [vmem:[%s365 + $0x10] sm:$0xf]
        %v466 = vld [vmem:[%s365 + $0x14] sm:$0xf]
        %v467 = vld [vmem:[%s365 + $0x18] sm:$0xf]
        %v468 = vld [vmem:[%s365 + $0x1c] sm:$0xf]
        %v469 = vld [vmem:[%s365 + $0x20] sm:$0xf]
        %v470 = vld [vmem:[%s365 + $0x24] sm:$0xf]
        %v471 = vld [vmem:[%s365 + $0x28] sm:$0xf]
        %v472 = vld [vmem:[%s365 + $0x2c] sm:$0xf]
        %v473 = vld [vmem:[%s365 + $0x30] sm:$0xf]
        %v474 = vld [vmem:[%s365 + $0x34] sm:$0xf]
        %v475 = vld [vmem:[%s365 + $0x38] sm:$0xf]
        %v476 = vld [vmem:[%s365 + $0x3c] sm:$0xf]
        %v493 = vunpack.c.l.b16 %v461
        %v494 = vunpack.c.l.b16 %v462
        %v495 = vunpack.c.l.b16 %v463
        %v496 = vunpack.c.l.b16 %v464
        %v497 = vunpack.c.l.b16 %v465
        %v498 = vunpack.c.l.b16 %v466
        %v499 = vunpack.c.l.b16 %v467
        %v500 = vunpack.c.l.b16 %v468
        %v501 = vunpack.c.l.b16 %v469
        %v502 = vunpack.c.l.b16 %v470
        %v503 = vunpack.c.l.b16 %v471
        %v504 = vunpack.c.l.b16 %v472
        %v505 = vunpack.c.l.b16 %v473
        %v506 = vunpack.c.l.b16 %v474
        %v507 = vunpack.c.l.b16 %v475
        %v508 = vunpack.c.l.b16 %v476
        %v509 = vpack.c.b16 %v494, %v493
        %v510 = vpack.c.b16 %v496, %v495
        %v511 = vpack.c.b16 %v498, %v497
        %v512 = vpack.c.b16 %v500, %v499
        %v513 = vpack.c.b16 %v502, %v501
        %v514 = vpack.c.b16 %v504, %v503
        %v515 = vpack.c.b16 %v506, %v505
        %v516 = vpack.c.b16 %v508, %v507
        %525 = vmatprep.subr.bf16.mxu0 0
        %526 = vmatpush1.bf16.msra.mxu0 %v516
        %527 = vmatprep.subr.bf16.mxu0 0
        %528 = vmatpush1.bf16.msra.mxu0 %v515
        %529 = vmatprep.subr.bf16.mxu0 0
        %530 = vmatpush1.bf16.msra.mxu0 %v514
        %531 = vmatprep.subr.bf16.mxu0 0
        %532 = vmatpush1.bf16.msra.mxu0 %v513
        %533 = vmatprep.subr.bf16.mxu0 0
        %534 = vmatpush1.bf16.msra.mxu0 %v512
        %535 = vmatprep.subr.bf16.mxu0 0
        %536 = vmatpush1.bf16.msra.mxu0 %v511
        %537 = vmatprep.subr.bf16.mxu0 0
        %538 = vmatpush1.bf16.msra.mxu0 %v510
        %539 = vmatprep.subr.bf16.mxu0 0
        %540 = vmatpush1.bf16.msra.mxu0 %v509
        %541 = vmatprep.subr.bf16.mxu0 0
        %542 = vmatpush2.bf16.msra.mxu0 0
        %543 = vmatprep.subr.bf16.mxu0 0
        %544 = vmatpush2.bf16.msra.mxu0 0
        %545 = vmatprep.subr.bf16.mxu0 0
        %546 = vmatpush2.bf16.msra.mxu0 0
        %547 = vmatprep.subr.bf16.mxu0 0
        %548 = vmatpush2.bf16.msra.mxu0 0
        %549 = vmatprep.subr.bf16.mxu0 0
        %550 = vmatpush2.bf16.msra.mxu0 0
        %551 = vmatprep.subr.bf16.mxu0 0
        %552 = vmatpush2.bf16.msra.mxu0 0
        %553 = vmatprep.subr.bf16.mxu0 0
        %554 = vmatpush2.bf16.msra.mxu0 0
        %555 = vmatprep.subr.bf16.mxu0 0
        %556 = vmatpush2.bf16.msra.mxu0 0
        %557 = vmatprep.mubr.bf16.mxu0 0
        %558 = vmatmul.mubr.bf16.gmra.mxu0 %v459
        %v559 = vpop.f32.mrf.mxu0
        %v560 = vadd.f32 0.0, %v559
        %v561 = vpop.f32.mrf.mxu0
        %v562 = vpop.f32.mrf.mxu0
        %v563 = vpop.f32.mrf.mxu0
        %564 = vdwg.mxu0
        %s565 = sld [smem:[#allocation4]]
        %v566 = vstv %s565
        %v567 = vmul.f32 %v566, %v560
        %v568 = vadd.f32 %v460, %v567
        %v569 = vld [vmem:[%s374] sm:$0xf]
        %v570 = vld [vmem:[%s374 + $0x4] sm:$0xf]
        %v571 = vld [vmem:[%s374 + $0x8] sm:$0xf]
        %v572 = vld [vmem:[%s374 + $0xc] sm:$0xf]
        %v573 = vld [vmem:[%s374 + $0x10] sm:$0xf]
        %v574 = vld [vmem:[%s374 + $0x14] sm:$0xf]
        %v575 = vld [vmem:[%s374 + $0x18] sm:$0xf]
        %v576 = vld [vmem:[%s374 + $0x1c] sm:$0xf]
        %v577 = vld [vmem:[%s374 + $0x20] sm:$0xf]
        %v578 = vld [vmem:[%s374 + $0x24] sm:$0xf]
        %v579 = vld [vmem:[%s374 + $0x28] sm:$0xf]
        %v580 = vld [vmem:[%s374 + $0x2c] sm:$0xf]
        %v581 = vld [vmem:[%s374 + $0x30] sm:$0xf]
        %v582 = vld [vmem:[%s374 + $0x34] sm:$0xf]
        %v583 = vld [vmem:[%s374 + $0x38] sm:$0xf]
        %v584 = vld [vmem:[%s374 + $0x3c] sm:$0xf]
        %v601 = vunpack.c.l.b16 %v569
        %v602 = vunpack.c.l.b16 %v570
        %v603 = vunpack.c.l.b16 %v571
        %v604 = vunpack.c.l.b16 %v572
        %v605 = vunpack.c.l.b16 %v573
        %v606 = vunpack.c.l.b16 %v574
        %v607 = vunpack.c.l.b16 %v575
        %v608 = vunpack.c.l.b16 %v576
        %v609 = vunpack.c.l.b16 %v577
        %v610 = vunpack.c.l.b16 %v578
        %v611 = vunpack.c.l.b16 %v579
        %v612 = vunpack.c.l.b16 %v580
        %v613 = vunpack.c.l.b16 %v581
        %v614 = vunpack.c.l.b16 %v582
        %v615 = vunpack.c.l.b16 %v583
        %v616 = vunpack.c.l.b16 %v584
        %v617 = vpack.c.b16 %v602, %v601
        %v618 = vpack.c.b16 %v604, %v603
        %v619 = vpack.c.b16 %v606, %v605
        %v620 = vpack.c.b16 %v608, %v607
        %v621 = vpack.c.b16 %v610, %v609
        %v622 = vpack.c.b16 %v612, %v611
        %v623 = vpack.c.b16 %v614, %v613
        %v624 = vpack.c.b16 %v616, %v615
        %633 = vmatprep.subr.bf16.mxu0 0
        %634 = vmatpush1.bf16.msra.mxu0 %v624
        %635 = vmatprep.subr.bf16.mxu0 0
        %636 = vmatpush1.bf16.msra.mxu0 %v623
        %637 = vmatprep.subr.bf16.mxu0 0
        %638 = vmatpush1.bf16.msra.mxu0 %v622
        %639 = vmatprep.subr.bf16.mxu0 0
        %640 = vmatpush1.bf16.msra.mxu0 %v621
        %641 = vmatprep.subr.bf16.mxu0 0
        %642 = vmatpush1.bf16.msra.mxu0 %v620
        %643 = vmatprep.subr.bf16.mxu0 0
        %644 = vmatpush1.bf16.msra.mxu0 %v619
        %645 = vmatprep.subr.bf16.mxu0 0
        %646 = vmatpush1.bf16.msra.mxu0 %v618
        %647 = vmatprep.subr.bf16.mxu0 0
        %648 = vmatpush1.bf16.msra.mxu0 %v617
        %649 = vmatprep.subr.bf16.mxu0 0
        %650 = vmatpush2.bf16.msra.mxu0 0
        %651 = vmatprep.subr.bf16.mxu0 0
        %652 = vmatpush2.bf16.msra.mxu0 0
        %653 = vmatprep.subr.bf16.mxu0 0
        %654 = vmatpush2.bf16.msra.mxu0 0
        %655 = vmatprep.subr.bf16.mxu0 0
        %656 = vmatpush2.bf16.msra.mxu0 0
        %657 = vmatprep.subr.bf16.mxu0 0
        %658 = vmatpush2.bf16.msra.mxu0 0
        %659 = vmatprep.subr.bf16.mxu0 0
        %660 = vmatpush2.bf16.msra.mxu0 0
        %661 = vmatprep.subr.bf16.mxu0 0
        %662 = vmatpush2.bf16.msra.mxu0 0
        %663 = vmatprep.subr.bf16.mxu0 0
        %664 = vmatpush2.bf16.msra.mxu0 0
        %665 = vmatprep.mubr.bf16.mxu0 0
        %666 = vmatmul.mubr.bf16.gmra.mxu0 %v459
        %v667 = vpop.f32.mrf.mxu0
        %v668 = vadd.f32 0.0, %v667
        %v669 = vpop.f32.mrf.mxu0
        %v670 = vpop.f32.mrf.mxu0
        %v671 = vpop.f32.mrf.mxu0
        %672 = vdwg.mxu0
        %s673 = sld [smem:[#allocation4 + $0x1]]
        %v674 = vstv %s673
        %v675 = vmul.f32 %v674, %v668
        %v676 = vadd.f32 %v568, %v675
        %v677 = vld [vmem:[%s383] sm:$0xf]
        %v678 = vld [vmem:[%s383 + $0x4] sm:$0xf]
        %v679 = vld [vmem:[%s383 + $0x8] sm:$0xf]
        %v680 = vld [vmem:[%s383 + $0xc] sm:$0xf]
        %v681 = vld [vmem:[%s383 + $0x10] sm:$0xf]
        %v682 = vld [vmem:[%s383 + $0x14] sm:$0xf]
        %v683 = vld [vmem:[%s383 + $0x18] sm:$0xf]
        %v684 = vld [vmem:[%s383 + $0x1c] sm:$0xf]
        %v685 = vld [vmem:[%s383 + $0x20] sm:$0xf]
        %v686 = vld [vmem:[%s383 + $0x24] sm:$0xf]
        %v687 = vld [vmem:[%s383 + $0x28] sm:$0xf]
        %v688 = vld [vmem:[%s383 + $0x2c] sm:$0xf]
        %v689 = vld [vmem:[%s383 + $0x30] sm:$0xf]
        %v690 = vld [vmem:[%s383 + $0x34] sm:$0xf]
        %v691 = vld [vmem:[%s383 + $0x38] sm:$0xf]
        %v692 = vld [vmem:[%s383 + $0x3c] sm:$0xf]
        %v709 = vunpack.c.l.b16 %v677
        %v710 = vunpack.c.l.b16 %v678
        %v711 = vunpack.c.l.b16 %v679
        %v712 = vunpack.c.l.b16 %v680
        %v713 = vunpack.c.l.b16 %v681
        %v714 = vunpack.c.l.b16 %v682
        %v715 = vunpack.c.l.b16 %v683
        %v716 = vunpack.c.l.b16 %v684
        %v717 = vunpack.c.l.b16 %v685
        %v718 = vunpack.c.l.b16 %v686
        %v719 = vunpack.c.l.b16 %v687
        %v720 = vunpack.c.l.b16 %v688
        %v721 = vunpack.c.l.b16 %v689
        %v722 = vunpack.c.l.b16 %v690
        %v723 = vunpack.c.l.b16 %v691
        %v724 = vunpack.c.l.b16 %v692
        %v725 = vpack.c.b16 %v710, %v709
        %v726 = vpack.c.b16 %v712, %v711
        %v727 = vpack.c.b16 %v714, %v713
        %v728 = vpack.c.b16 %v716, %v715
        %v729 = vpack.c.b16 %v718, %v717
        %v730 = vpack.c.b16 %v720, %v719
        %v731 = vpack.c.b16 %v722, %v721
        %v732 = vpack.c.b16 %v724, %v723
        %741 = vmatprep.subr.bf16.mxu0 0
        %742 = vmatpush1.bf16.msra.mxu0 %v732
        %743 = vmatprep.subr.bf16.mxu0 0
        %744 = vmatpush1.bf16.msra.mxu0 %v731
        %745 = vmatprep.subr.bf16.mxu0 0
        %746 = vmatpush1.bf16.msra.mxu0 %v730
        %747 = vmatprep.subr.bf16.mxu0 0
        %748 = vmatpush1.bf16.msra.mxu0 %v729
        %749 = vmatprep.subr.bf16.mxu0 0
        %750 = vmatpush1.bf16.msra.mxu0 %v728
        %751 = vmatprep.subr.bf16.mxu0 0
        %752 = vmatpush1.bf16.msra.mxu0 %v727
        %753 = vmatprep.subr.bf16.mxu0 0
        %754 = vmatpush1.bf16.msra.mxu0 %v726
        %755 = vmatprep.subr.bf16.mxu0 0
        %756 = vmatpush1.bf16.msra.mxu0 %v725
        %757 = vmatprep.subr.bf16.mxu0 0
        %758 = vmatpush2.bf16.msra.mxu0 0
        %759 = vmatprep.subr.bf16.mxu0 0
        %760 = vmatpush2.bf16.msra.mxu0 0
        %761 = vmatprep.subr.bf16.mxu0 0
        %762 = vmatpush2.bf16.msra.mxu0 0
        %763 = vmatprep.subr.bf16.mxu0 0
        %764 = vmatpush2.bf16.msra.mxu0 0
        %765 = vmatprep.subr.bf16.mxu0 0
        %766 = vmatpush2.bf16.msra.mxu0 0
        %767 = vmatprep.subr.bf16.mxu0 0
        %768 = vmatpush2.bf16.msra.mxu0 0
        %769 = vmatprep.subr.bf16.mxu0 0
        %770 = vmatpush2.bf16.msra.mxu0 0
        %771 = vmatprep.subr.bf16.mxu0 0
        %772 = vmatpush2.bf16.msra.mxu0 0
        %773 = vmatprep.mubr.bf16.mxu0 0
        %774 = vmatmul.mubr.bf16.gmra.mxu0 %v459
        %v775 = vpop.f32.mrf.mxu0
        %v776 = vadd.f32 0.0, %v775
        %v777 = vpop.f32.mrf.mxu0
        %v778 = vpop.f32.mrf.mxu0
        %v779 = vpop.f32.mrf.mxu0
        %780 = vdwg.mxu0
        %s781 = sld [smem:[#allocation4 + $0x2]]
        %v782 = vstv %s781
        %v783 = vmul.f32 %v782, %v776
        %v784 = vadd.f32 %v676, %v783
        %v785 = vld [vmem:[%s392] sm:$0xf]
        %v786 = vld [vmem:[%s392 + $0x4] sm:$0xf]
        %v787 = vld [vmem:[%s392 + $0x8] sm:$0xf]
        %v788 = vld [vmem:[%s392 + $0xc] sm:$0xf]
        %v789 = vld [vmem:[%s392 + $0x10] sm:$0xf]
        %v790 = vld [vmem:[%s392 + $0x14] sm:$0xf]
        %v791 = vld [vmem:[%s392 + $0x18] sm:$0xf]
        %v792 = vld [vmem:[%s392 + $0x1c] sm:$0xf]
        %v793 = vld [vmem:[%s392 + $0x20] sm:$0xf]
        %v794 = vld [vmem:[%s392 + $0x24] sm:$0xf]
        %v795 = vld [vmem:[%s392 + $0x28] sm:$0xf]
        %v796 = vld [vmem:[%s392 + $0x2c] sm:$0xf]
        %v797 = vld [vmem:[%s392 + $0x30] sm:$0xf]
        %v798 = vld [vmem:[%s392 + $0x34] sm:$0xf]
        %v799 = vld [vmem:[%s392 + $0x38] sm:$0xf]
        %v800 = vld [vmem:[%s392 + $0x3c] sm:$0xf]
        %v817 = vunpack.c.l.b16 %v785
        %v818 = vunpack.c.l.b16 %v786
        %v819 = vunpack.c.l.b16 %v787
        %v820 = vunpack.c.l.b16 %v788
        %v821 = vunpack.c.l.b16 %v789
        %v822 = vunpack.c.l.b16 %v790
        %v823 = vunpack.c.l.b16 %v791
        %v824 = vunpack.c.l.b16 %v792
        %v825 = vunpack.c.l.b16 %v793
        %v826 = vunpack.c.l.b16 %v794
        %v827 = vunpack.c.l.b16 %v795
        %v828 = vunpack.c.l.b16 %v796
        %v829 = vunpack.c.l.b16 %v797
        %v830 = vunpack.c.l.b16 %v798
        %v831 = vunpack.c.l.b16 %v799
        %v832 = vunpack.c.l.b16 %v800
        %v833 = vpack.c.b16 %v818, %v817
        %v834 = vpack.c.b16 %v820, %v819
        %v835 = vpack.c.b16 %v822, %v821
        %v836 = vpack.c.b16 %v824, %v823
        %v837 = vpack.c.b16 %v826, %v825
        %v838 = vpack.c.b16 %v828, %v827
        %v839 = vpack.c.b16 %v830, %v829
        %v840 = vpack.c.b16 %v832, %v831
        %849 = vmatprep.subr.bf16.mxu0 0
        %850 = vmatpush1.bf16.msra.mxu0 %v840
        %851 = vmatprep.subr.bf16.mxu0 0
        %852 = vmatpush1.bf16.msra.mxu0 %v839
        %853 = vmatprep.subr.bf16.mxu0 0
        %854 = vmatpush1.bf16.msra.mxu0 %v838
        %855 = vmatprep.subr.bf16.mxu0 0
        %856 = vmatpush1.bf16.msra.mxu0 %v837
        %857 = vmatprep.subr.bf16.mxu0 0
        %858 = vmatpush1.bf16.msra.mxu0 %v836
        %859 = vmatprep.subr.bf16.mxu0 0
        %860 = vmatpush1.bf16.msra.mxu0 %v835
        %861 = vmatprep.subr.bf16.mxu0 0
        %862 = vmatpush1.bf16.msra.mxu0 %v834
        %863 = vmatprep.subr.bf16.mxu0 0
        %864 = vmatpush1.bf16.msra.mxu0 %v833
        %865 = vmatprep.subr.bf16.mxu0 0
        %866 = vmatpush2.bf16.msra.mxu0 0
        %867 = vmatprep.subr.bf16.mxu0 0
        %868 = vmatpush2.bf16.msra.mxu0 0
        %869 = vmatprep.subr.bf16.mxu0 0
        %870 = vmatpush2.bf16.msra.mxu0 0
        %871 = vmatprep.subr.bf16.mxu0 0
        %872 = vmatpush2.bf16.msra.mxu0 0
        %873 = vmatprep.subr.bf16.mxu0 0
        %874 = vmatpush2.bf16.msra.mxu0 0
        %875 = vmatprep.subr.bf16.mxu0 0
        %876 = vmatpush2.bf16.msra.mxu0 0
        %877 = vmatprep.subr.bf16.mxu0 0
        %878 = vmatpush2.bf16.msra.mxu0 0
        %879 = vmatprep.subr.bf16.mxu0 0
        %880 = vmatpush2.bf16.msra.mxu0 0
        %881 = vmatprep.mubr.bf16.mxu0 0
        %882 = vmatmul.mubr.bf16.gmra.mxu0 %v459
        %v883 = vpop.f32.mrf.mxu0
        %v884 = vadd.f32 0.0, %v883
        %v885 = vpop.f32.mrf.mxu0
        %v886 = vpop.f32.mrf.mxu0
        %v887 = vpop.f32.mrf.mxu0
        %888 = vdwg.mxu0
        %s889 = sld [smem:[#allocation4 + $0x3]]
        %v890 = vstv %s889
        %v891 = vmul.f32 %v890, %v884
        %v892 = vadd.f32 %v784, %v891
        %893 = vst [vmem:[%s439] sm:$0x1] %v892
        %v894 = vld [vmem:[#allocation2] sm:$0x1]
        %v895 = vunpack.c.l.bf16 %v459
        %vm896 = vcmask 1040384
        %v897 = vsel %vm896, %v895, 0.0
        %898 = vadd.xlane.f32.xlu0 %v897
        %v899 = vpop.xlane.xlu0 %898
        %v900 = vadd.f32 %v894, %v899
        %vm901 = vcmask 0
        %902 = vst.msk [vmem:[#allocation2] sm:$0x1] %vm901, %v900
        %p903 = scmp.eq.s32.totalorder %s42, 2
        // Predicated region
        $region61: #{tpu_custom_call.1} parent=39 // pred_check
          %p904 = pneg %p903
        $region62: #{tpu_custom_call.1} parent=39 // pred_check_branch
          %906 = sbr.rel (%p904) target = $region64
        $region63: #{tpu_custom_call.1} parent=39 // pred_region
          %v907 = vld [vmem:[#allocation2] sm:$0x1]
          %v908 = vmax.f32 %v907, 1e-09
          %v909 = vld [vmem:[%s439] sm:$0x1]
          %911 = vset.pattern.permute.xlu0 0
          %912 = vperm.xlu0 %911, %v908
          %v913 = vpop.permute.xlu0 %912
          %v915 = vlaneseq
          %v916 = vshrl.u32 %v915, 7
          %v917 = vsub.s32 0, %v916
          %v918 = vrot.slane %v913, %v917
          %v919 = vrcp.pop %v918
          %v920 = vmul.f32 %v909, %v919
          %921 = vst [vmem:[%s439] sm:$0x1] %v920
        $region64: #{tpu_custom_call.1} parent=39 // pred_fallthru
          _
        %s922 = sand.u32 %s212, 1
        %s923 = scalar_lea.sflag [#allocation7], %s922
        %s924 = sand.u32 %s212, 1
        %s925 = scalar_lea.vmem [#allocation13], %s924
        // Predicated region
        $region65: #{tpu_custom_call.1} parent=39 // pred_check
          %p926 = pneg %p222
        $region66: #{tpu_custom_call.1} parent=39 // pred_check_branch
          %928 = sbr.rel (%p926) target = $region68
        $region67: #{tpu_custom_call.1} parent=39 // pred_region
          %s930 = ssub.s32 16, 16
          %931 = vsyncadd %s923, %s930
          %s932 = smul.addr %s40, 2
          %s933 = sadd.s32 %s41, %s932
          %s934 = smul.addr %s933, 16
          %s935 = scalar_lea.hbm %s6, %s934
          %s937 = sshll.u32 %s925, 4
          %s938 = int_to_ptr.vmem [resolvable:$true] %s937
          %940 = dma.vmem_to_hbm [thread:$0]  %s938, 16, %s935, %s923
        $region68: #{tpu_custom_call.1} parent=39 // pred_fallthru
          _
      $region40: #{tpu_custom_call.1} parent=5 // pred_fallthru
        _
      %p941 = scmp.le.s32.totalorder 2, %s30
      // Predicated region
      $region69: #{tpu_custom_call.1} parent=5 // pred_check
        %p942 = pneg %p941
      $region70: #{tpu_custom_call.1} parent=5 // pred_check_branch
        %944 = sbr.rel (%p942) target = $region72
      $region71: #{tpu_custom_call.1} parent=5 // pred_region
        %s945 = ssub.s32 %s30, 2
        // Predicated region
        $region73: #{tpu_custom_call.1} parent=71 // pred_check
          %p946 = pneg %p228
        $region74: #{tpu_custom_call.1} parent=71 // pred_check_branch
          %948 = sbr.rel (%p946) target = $region76
        $region75: #{tpu_custom_call.1} parent=71 // pred_region
          %s949 = sand.u32 %s213, 1
          %s950 = scalar_lea.sflag [#allocation7], %s949
          %s951 = sand.u32 %s213, 1
          %s952 = scalar_lea.vmem [#allocation13], %s951
          %953 = dma.done %s950, 16
        $region76: #{tpu_custom_call.1} parent=71 // pred_fallthru
          _
      $region72: #{tpu_custom_call.1} parent=5 // pred_fallthru
        _
    $region6: #{tpu_custom_call.1} parent=1 // loop_footer
      %s34 = sadd.s32 1, %s30
    $region7: #{tpu_custom_call.1} parent=1 // loop_footer_branch
      %29 = sbr.rel target = $region3
    $region8: #{tpu_custom_call.1} parent=1 // loop_exit
      _
    %954 = vsyncpa [#allocation6], 1
    %s955 = scalar_lea.sflag [#allocation6], 1
    %956 = vsyncpa %s955, 1
    %957 = vsyncpa [#allocation9], 1
    %s958 = scalar_lea.sflag [#allocation9], 1
    %959 = vsyncpa %s958, 1
    %960 = vsyncpa [#allocation12], 1
    %s961 = scalar_lea.sflag [#allocation12], 1
    %962 = vsyncpa %s961, 1
    %963 = vsyncpa [#allocation7], 1
    %s964 = scalar_lea.sflag [#allocation7], 1
    %965 = vsyncpa %s964, 1

</llo_original>
